<compile_context>
chip_gen: v5e
topology: v5e:2x2
jax: 0.10.0
libtpu: 0.0.40
codegen_flags: <defaults>
</compile_context>

<pallas_src>
import functools

import jax
import jax.numpy as jnp
from jax.experimental import pallas as pl
from jax.experimental.pallas import tpu as pltpu


def _ssa_kernel(feat_ref, idx_ref, wqkv_ref, bqkv_ref, out_ref):
    feat = feat_ref[...]                                   # (N, dp)  f32
    idx = idx_ref[...]                                     # (n, 1)   int32
    n = idx.shape[0]
    N, dp = feat.shape

    # --- in-kernel gather of the sampled rows: one-hot @ features (MXU) ---
    col = jax.lax.broadcasted_iota(jnp.int32, (n, N), 1)
    onehot = (col == idx).astype(feat.dtype)                           # (n, N)
    sf = jnp.dot(onehot, feat, preferred_element_type=jnp.float32)     # (n, dp)

    # --- fused Q/K/V projection: a single MXU dot against (dp, 3*dp) ---
    qkv = jnp.dot(sf, wqkv_ref[...], preferred_element_type=jnp.float32)
    qkv = qkv + bqkv_ref[...]                                          # (n, 3*dp)
    q = qkv[:, :dp]                     # static, 128-lane-aligned slices
    k = qkv[:, dp:2 * dp]
    v = qkv[:, 2 * dp:]

    # --- attention scores: Q @ K^T without materializing a transpose ---
    scores = jax.lax.dot_general(
        q, k, (((1,), (1,)), ((), ())),
        preferred_element_type=jnp.float32)                            # (n, n)

    # --- torch semantics: divide by the GLOBAL max score, then row softmax ---
    gmax = jnp.max(scores, axis=-1, keepdims=True)                     # (n, 1)
    gmax = jnp.max(gmax, axis=-2, keepdims=True)                       # (1, 1)
    scaled = scores * pl.reciprocal(gmax, approx=True)                 # EUP recip

    row_max = jnp.max(scaled, axis=-1, keepdims=True)
    e = jnp.exp(scaled - row_max)
    denom = jnp.sum(e, axis=-1, keepdims=True)
    weights = e * pl.reciprocal(denom, approx=True)                    # EUP recip

    # --- attention output and row-mean (keepdim) ---
    attn = jnp.dot(weights, v, preferred_element_type=jnp.float32)     # (n, dp)
    out_ref[...] = jnp.mean(attn, axis=0, keepdims=True)               # (1, dp)


@functools.partial(jax.jit, static_argnums=(2,))
def sampled_self_attention(features, params, num_samples, key):
    """JAX/Pallas equivalent of SampledSelfAttention.forward."""
    N, d = features.shape
    n = num_samples
    dp = ((d + 127) // 128) * 128            # pad feature dim to the 128-lane width

    wq, bq, wk, bk, wv, bv = params          # torch layout: W is (out, in)

    # Fused, pre-transposed, zero-padded QKV weight (dp, 3*dp) and bias (1, 3*dp).
    w_qkv = jnp.zeros((dp, 3 * dp), jnp.float32)
    b_qkv = jnp.zeros((1, 3 * dp), jnp.float32)
    for s, (w, b) in enumerate(((wq, bq), (wk, bk), (wv, bv))):
        w_qkv = w_qkv.at[:d, s * dp:s * dp + d].set(w.T)
        b_qkv = b_qkv.at[0, s * dp:s * dp + d].set(b)

    feat_pad = jnp.pad(features.astype(jnp.float32), ((0, 0), (0, dp - d)))  # (N, dp)

    # Random sampling of row indices (matches torch.randint; duplicates allowed).
    idx = jax.random.randint(key, (n, 1), 0, N, dtype=jnp.int32)

    vmem = pl.BlockSpec(memory_space=pltpu.MemorySpace.VMEM)
    mean_out = pl.pallas_call(
        _ssa_kernel,
        out_shape=jax.ShapeDtypeStruct((1, dp), jnp.float32),
        in_specs=[vmem, vmem, vmem, vmem],
        out_specs=vmem,
    )(feat_pad, idx, w_qkv, b_qkv)

    # Drop the inert padded columns; expand(num_features, -1) == broadcast of the mean row.
    return jnp.broadcast_to(mean_out[:, :d], (N, d))


def init_params(key, feature_dim):
    """Deterministic init of the three Linear layers (torch layout: (out, in))."""
    d = feature_dim
    keys = jax.random.split(key, 6)
    scale = 1.0 / jnp.sqrt(d)
    wq = jax.random.uniform(keys[0], (d, d), jnp.float32, -scale, scale)
    bq = jax.random.uniform(keys[1], (d,), jnp.float32, -scale, scale)
    wk = jax.random.uniform(keys[2], (d, d), jnp.float32, -scale, scale)
    bk = jax.random.uniform(keys[3], (d,), jnp.float32, -scale, scale)
    wv = jax.random.uniform(keys[4], (d, d), jnp.float32, -scale, scale)
    bv = jax.random.uniform(keys[5], (d,), jnp.float32, -scale, scale)
    return (wq, bq, wk, bk, wv, bv)


def _reference(features, params, num_samples, key):
    """Pure-JAX reference (same sampled indices: identical randint call)."""
    N, d = features.shape
    idx = jax.random.randint(key, (num_samples, 1), 0, N, dtype=jnp.int32)
    sf = features[idx[:, 0]]
    wq, bq, wk, bk, wv, bv = params
    q = sf @ wq.T + bq
    k = sf @ wk.T + bk
    v = sf @ wv.T + bv
    scores = q @ k.T
    w = jax.nn.softmax(scores / jnp.max(scores), axis=-1)
    out = w @ v
    return jnp.broadcast_to(jnp.mean(out, axis=0, keepdims=True), (N, d))


if __name__ == "__main__":
    # Small shapes consistent with the module's forward:
    N = 64            # number of input points/features
    feature_dim = 32
    num_samples = 16

    root = jax.random.PRNGKey(0)
    k_feat, k_param, k_sample = jax.random.split(root, 3)

    features = jax.random.normal(k_feat, (N, feature_dim), jnp.float32)
    params = init_params(k_param, feature_dim)

    out = sampled_self_attention(features, params, num_samples, k_sample)
    out = jax.block_until_ready(out)

    ref = _reference(features, params, num_samples, k_sample)
    assert out.shape == (N, feature_dim)
    # Tolerance loosened vs 1e-5 because both divides now use EUP approx reciprocals.
    assert jnp.allclose(out, ref, atol=2e-3, rtol=2e-3), "mismatch vs reference"

    print("KERNEL_OK")
</pallas_src>

<mosaic_0001>
module attributes {stable_mosaic.version = 11 : i64} {
  func.func @_ssa_kernel(%arg0: memref<64x128xf32, #tpu.memory_space<vmem>>, %arg1: memref<16x1xi32, #tpu.memory_space<vmem>>, %arg2: memref<128x384xf32, #tpu.memory_space<vmem>>, %arg3: memref<1x384xf32, #tpu.memory_space<vmem>>, %arg4: memref<1x128xf32, #tpu.memory_space<vmem>>) attributes {dimension_semantics = [], scalar_prefetch = 0 : i64, scratch_operands = 0 : i64, tpu.core_type = #tpu.core_type<tc>} {
    %c0 = arith.constant 0 : index
    %c0_0 = arith.constant 0 : index
    %0 = vector.load %arg0[%c0, %c0_0] : memref<64x128xf32, #tpu.memory_space<vmem>>, vector<64x128xf32>
    %c0_1 = arith.constant 0 : index
    %c0_2 = arith.constant 0 : index
    %1 = vector.load %arg1[%c0_1, %c0_2] : memref<16x1xi32, #tpu.memory_space<vmem>>, vector<16x1xi32>
    %2 = tpu.iota {dimensions = array<i32: 1>} : vector<16x64xi32>
    %3 = vector.broadcast %1 : vector<16x1xi32> to vector<16x64xi32>
    %4 = arith.cmpi eq, %2, %3 : vector<16x64xi32>
    %5 = arith.extui %4 : vector<16x64xi1> to vector<16x64xi32>
    %6 = arith.sitofp %5 : vector<16x64xi32> to vector<16x64xf32>
    %cst = arith.constant dense<0.000000e+00> : vector<16x128xf32>
    %7 = tpu.matmul %6, %0, %cst {dimension_numbers = #tpu.dot_dimension_numbers<[1], [0], [0], [1], [0, 0, 1, 1], [], []>} : vector<16x64xf32>, vector<64x128xf32>, vector<16x128xf32> -> vector<16x128xf32>
    %c0_3 = arith.constant 0 : index
    %c0_4 = arith.constant 0 : index
    %8 = vector.load %arg2[%c0_3, %c0_4] : memref<128x384xf32, #tpu.memory_space<vmem>>, vector<128x384xf32>
    %cst_5 = arith.constant dense<0.000000e+00> : vector<16x384xf32>
    %9 = tpu.matmul %7, %8, %cst_5 {dimension_numbers = #tpu.dot_dimension_numbers<[1], [0], [0], [1], [0, 0, 1, 1], [], []>} : vector<16x128xf32>, vector<128x384xf32>, vector<16x384xf32> -> vector<16x384xf32>
    %c0_6 = arith.constant 0 : index
    %c0_7 = arith.constant 0 : index
    %10 = vector.load %arg3[%c0_6, %c0_7] : memref<1x384xf32, #tpu.memory_space<vmem>>, vector<1x384xf32>
    %11 = vector.broadcast %10 : vector<1x384xf32> to vector<16x384xf32>
    %12 = arith.addf %9, %11 : vector<16x384xf32>
    %13 = vector.extract_strided_slice %12 {offsets = [0, 0], sizes = [16, 128], strides = [1, 1]} : vector<16x384xf32> to vector<16x128xf32>
    %14 = vector.extract_strided_slice %12 {offsets = [0, 128], sizes = [16, 128], strides = [1, 1]} : vector<16x384xf32> to vector<16x128xf32>
    %15 = vector.extract_strided_slice %12 {offsets = [0, 256], sizes = [16, 128], strides = [1, 1]} : vector<16x384xf32> to vector<16x128xf32>
    %cst_8 = arith.constant dense<0.000000e+00> : vector<16x16xf32>
    %16 = tpu.matmul %13, %14, %cst_8 {dimension_numbers = #tpu.dot_dimension_numbers<[1], [1], [0], [0], [0, 0, 1, 0], [], []>} : vector<16x128xf32>, vector<16x128xf32>, vector<16x16xf32> -> vector<16x16xf32>
    %cst_9 = arith.constant dense<0xFF800000> : vector<16xf32>
    %17 = vector.multi_reduction <maximumf>, %16, %cst_9 [1] : vector<16x16xf32> to vector<16xf32>
    %18 = vector.shape_cast %17 : vector<16xf32> to vector<16x1xf32>
    %cst_10 = arith.constant dense<0xFF800000> : vector<1xf32>
    %19 = vector.multi_reduction <maximumf>, %18, %cst_10 [0] : vector<16x1xf32> to vector<1xf32>
    %20 = vector.shape_cast %19 : vector<1xf32> to vector<1x1xf32>
    %21 = tpu.reciprocal %20 {approx = true} : vector<1x1xf32> -> vector<1x1xf32>
    %22 = vector.broadcast %21 : vector<1x1xf32> to vector<16x16xf32>
    %23 = arith.mulf %16, %22 : vector<16x16xf32>
    %cst_11 = arith.constant dense<0xFF800000> : vector<16xf32>
    %24 = vector.multi_reduction <maximumf>, %23, %cst_11 [1] : vector<16x16xf32> to vector<16xf32>
    %25 = vector.shape_cast %24 : vector<16xf32> to vector<16x1xf32>
    %26 = vector.broadcast %25 : vector<16x1xf32> to vector<16x16xf32>
    %27 = arith.subf %23, %26 : vector<16x16xf32>
    %28 = math.exp %27 : vector<16x16xf32>
    %cst_12 = arith.constant dense<0.000000e+00> : vector<16xf32>
    %29 = vector.multi_reduction <add>, %28, %cst_12 [1] : vector<16x16xf32> to vector<16xf32>
    %30 = vector.shape_cast %29 : vector<16xf32> to vector<16x1xf32>
    %31 = tpu.reciprocal %30 {approx = true} : vector<16x1xf32> -> vector<16x1xf32>
    %32 = vector.broadcast %31 : vector<16x1xf32> to vector<16x16xf32>
    %33 = arith.mulf %28, %32 : vector<16x16xf32>
    %cst_13 = arith.constant dense<0.000000e+00> : vector<16x128xf32>
    %34 = tpu.matmul %33, %15, %cst_13 {dimension_numbers = #tpu.dot_dimension_numbers<[1], [0], [0], [1], [0, 0, 1, 1], [], []>} : vector<16x16xf32>, vector<16x128xf32>, vector<16x128xf32> -> vector<16x128xf32>
    %cst_14 = arith.constant dense<0.000000e+00> : vector<128xf32>
    %35 = vector.multi_reduction <add>, %34, %cst_14 [0] : vector<16x128xf32> to vector<128xf32>
    %36 = vector.shape_cast %35 : vector<128xf32> to vector<1x128xf32>
    %cst_15 = arith.constant 1.600000e+01 : f32
    %37 = vector.broadcast %cst_15 : f32 to vector<1x128xf32>
    %38 = arith.divf %36, %37 : vector<1x128xf32>
    %c0_16 = arith.constant 0 : index
    %c0_17 = arith.constant 0 : index
    %39 = vector.load %arg4[%c0_16, %c0_17] : memref<1x128xf32, #tpu.memory_space<vmem>>, vector<1x128xf32>
    tpu.vector_store %arg4[%c0_16, %c0_17], %38 {strides = array<i32>} : memref<1x128xf32, #tpu.memory_space<vmem>>, vector<1x128xf32>,
    return
  }
}

</mosaic_0001>

<llo_original>
// kernel: sampled_self_attention.1
$region0: #{sampled_self_attention.1}
  #allocation0 [shape = 'u32[]', space=smem, size = 0x4, offset = 0x4, fixed_abs, tag = 'smem constant byte address 0x4 - core index']
  #allocation1 [shape = 'u32[72,128]{1,0:T(1,128)}', space=vmem, size = 0x9000, scoped, tag = 'internal scratch']
  %s0 = inlined_call_operand.vmem [shape: f32[64,128], index: 0, kind: input, shape index: {}]
  %s1 = inlined_call_operand.vmem [shape: s32[16,1], index: 1, kind: input, shape index: {}]
  %s2 = inlined_call_operand.vmem [shape: f32[128,384], index: 2, kind: input, shape index: {}]
  %s3 = inlined_call_operand.vmem [shape: f32[1,384], index: 3, kind: input, shape index: {}]
  %s4 = inlined_call_operand.vmem [shape: f32[1,128], index: 4, kind: output, shape index: {}]
  %s5 = sld [smem:[#allocation0]]
  $region26: #{sampled_self_attention.1} parent=0
    _
  %s7 = ssub.s32 1, %s5
  %s8 = scalar_select 0, %s7, %s5
  // Predicated region
  $region2: #{sampled_self_attention.1} parent=0 // pred_check
    _
  $region3: #{sampled_self_attention.1} parent=0 // pred_check_branch
    %10 = sbr.rel (0) target = $region5
  $region4: #{sampled_self_attention.1} parent=0 // pred_region
    _
  $region5: #{sampled_self_attention.1} parent=0 // pred_fallthru
    _
  // Predicated region
  $region6: #{sampled_self_attention.1} parent=0 // pred_check
    _
  $region7: #{sampled_self_attention.1} parent=0 // pred_check_branch
    %12 = sbr.rel (0) target = $region9
  $region8: #{sampled_self_attention.1} parent=0 // pred_region
    _
  $region9: #{sampled_self_attention.1} parent=0 // pred_fallthru
    _
  // Predicated region
  $region10: #{sampled_self_attention.1} parent=0 // pred_check
    _
  $region11: #{sampled_self_attention.1} parent=0 // pred_check_branch
    %14 = sbr.rel (0) target = $region13
  $region12: #{sampled_self_attention.1} parent=0 // pred_region
    _
  $region13: #{sampled_self_attention.1} parent=0 // pred_fallthru
    _
  // Predicated region
  $region14: #{sampled_self_attention.1} parent=0 // pred_check
    _
  $region15: #{sampled_self_attention.1} parent=0 // pred_check_branch
    %16 = sbr.rel (0) target = $region17
  $region16: #{sampled_self_attention.1} parent=0 // pred_region
    _
  $region17: #{sampled_self_attention.1} parent=0 // pred_fallthru
    _
  %v17 = vld [vmem:[%s0] sm:$0xff]
  %v18 = vld [vmem:[%s0 + $0x8] sm:$0xff]
  %v19 = vld [vmem:[%s0 + $0x10] sm:$0xff]
  %v20 = vld [vmem:[%s0 + $0x18] sm:$0xff]
  %v21 = vld [vmem:[%s0 + $0x20] sm:$0xff]
  %v22 = vld [vmem:[%s0 + $0x28] sm:$0xff]
  %v23 = vld [vmem:[%s0 + $0x30] sm:$0xff]
  %v24 = vld [vmem:[%s0 + $0x38] sm:$0xff]
  %v25 = vld [vmem:[%s1] sm:$0xff]
  %v26 = vld [vmem:[%s1 + $0x8] sm:$0xff]
  %v27 = vlaneseq
  %v28 = vand.u32 %v27, 127
  %29 = vset.pattern.permute.xlu0 0
  %30 = vperm.xlu0 %29, %v25
  %v31 = vpop.permute.xlu0 %30
  %32 = vset.pattern.permute.xlu0 0
  %33 = vperm.xlu0 %32, %v26
  %v34 = vpop.permute.xlu0 %33
  %vm35 = vcmp.eq.s32.totalorder %v28, %v31
  %vm36 = vcmp.eq.s32.totalorder %v28, %v34
  %v37 = vsel %vm35, 1, 0
  %v38 = vsel %vm36, 1, 0
  %v39 = vcvt.s32.f32 %v37
  %v40 = vcvt.s32.f32 %v38
  %vm41 = vcmask 523264
  %v43 = vsel %vm41, %v39, 0
  %v46 = vsel %vm41, %v40, 0
  %48 = vmatpush.msra.mxu0 0.0
  %49 = vmatpush.msra.mxu0 0.0
  %50 = vmatpush.msra.mxu0 0.0
  %51 = vmatpush.msra.mxu0 0.0
  %52 = vmatpush.msra.mxu0 0.0
  %53 = vmatpush.msra.mxu0 0.0
  %54 = vmatpush.msra.mxu0 0.0
  %55 = vmatpush.msra.mxu0 0.0
  %56 = vmatpush.msra.mxu0 %v24
  %57 = vmatpush.msra.mxu0 %v23
  %58 = vmatpush.msra.mxu0 %v22
  %59 = vmatpush.msra.mxu0 %v21
  %60 = vmatpush.msra.mxu0 %v20
  %61 = vmatpush.msra.mxu0 %v19
  %62 = vmatpush.msra.mxu0 %v18
  %63 = vmatpush.msra.mxu0 %v17
  %64 = vmatmul.f32.gmra.mxu0 %v43
  %v65 = vpop.f32.mrf.mxu0
  %v66 = vadd.f32 0.0, %v65
  %67 = vmatmul.f32.gmra.mxu0 %v46
  %v68 = vpop.f32.mrf.mxu0
  %v69 = vadd.f32 0.0, %v68
  %70 = vdwg.mxu0
  %v71 = vld [vmem:[%s2] sm:$0xff]
  %v72 = vld [vmem:[%s2 + $0x8] sm:$0xff]
  %v73 = vld [vmem:[%s2 + $0x10] sm:$0xff]
  %v74 = vld [vmem:[%s2 + $0x18] sm:$0xff]
  %v75 = vld [vmem:[%s2 + $0x20] sm:$0xff]
  %v76 = vld [vmem:[%s2 + $0x28] sm:$0xff]
  %v77 = vld [vmem:[%s2 + $0x30] sm:$0xff]
  %v78 = vld [vmem:[%s2 + $0x38] sm:$0xff]
  %v79 = vld [vmem:[%s2 + $0x40] sm:$0xff]
  %v80 = vld [vmem:[%s2 + $0x48] sm:$0xff]
  %v81 = vld [vmem:[%s2 + $0x50] sm:$0xff]
  %v82 = vld [vmem:[%s2 + $0x58] sm:$0xff]
  %v83 = vld [vmem:[%s2 + $0x60] sm:$0xff]
  %v84 = vld [vmem:[%s2 + $0x68] sm:$0xff]
  %v85 = vld [vmem:[%s2 + $0x70] sm:$0xff]
  %v86 = vld [vmem:[%s2 + $0x78] sm:$0xff]
  %v87 = vld [vmem:[%s2 + $0x80] sm:$0xff]
  %v88 = vld [vmem:[%s2 + $0x88] sm:$0xff]
  %v89 = vld [vmem:[%s2 + $0x90] sm:$0xff]
  %v90 = vld [vmem:[%s2 + $0x98] sm:$0xff]
  %v91 = vld [vmem:[%s2 + $0xa0] sm:$0xff]
  %v92 = vld [vmem:[%s2 + $0xa8] sm:$0xff]
  %v93 = vld [vmem:[%s2 + $0xb0] sm:$0xff]
  %v94 = vld [vmem:[%s2 + $0xb8] sm:$0xff]
  %v95 = vld [vmem:[%s2 + $0xc0] sm:$0xff]
  %v96 = vld [vmem:[%s2 + $0xc8] sm:$0xff]
  %v97 = vld [vmem:[%s2 + $0xd0] sm:$0xff]
  %v98 = vld [vmem:[%s2 + $0xd8] sm:$0xff]
  %v99 = vld [vmem:[%s2 + $0xe0] sm:$0xff]
  %v100 = vld [vmem:[%s2 + $0xe8] sm:$0xff]
  %v101 = vld [vmem:[%s2 + $0xf0] sm:$0xff]
  %v102 = vld [vmem:[%s2 + $0xf8] sm:$0xff]
  %v103 = vld [vmem:[%s2 + $0x100] sm:$0xff]
  %v104 = vld [vmem:[%s2 + $0x108] sm:$0xff]
  %v105 = vld [vmem:[%s2 + $0x110] sm:$0xff]
  %v106 = vld [vmem:[%s2 + $0x118] sm:$0xff]
  %v107 = vld [vmem:[%s2 + $0x120] sm:$0xff]
  %v108 = vld [vmem:[%s2 + $0x128] sm:$0xff]
  %v109 = vld [vmem:[%s2 + $0x130] sm:$0xff]
  %v110 = vld [vmem:[%s2 + $0x138] sm:$0xff]
  %v111 = vld [vmem:[%s2 + $0x140] sm:$0xff]
  %v112 = vld [vmem:[%s2 + $0x148] sm:$0xff]
  %v113 = vld [vmem:[%s2 + $0x150] sm:$0xff]
  %v114 = vld [vmem:[%s2 + $0x158] sm:$0xff]
  %v115 = vld [vmem:[%s2 + $0x160] sm:$0xff]
  %v116 = vld [vmem:[%s2 + $0x168] sm:$0xff]
  %v117 = vld [vmem:[%s2 + $0x170] sm:$0xff]
  %v118 = vld [vmem:[%s2 + $0x178] sm:$0xff]
  %v119 = vld [vmem:[%s3] sm:$0x7]
  %v121 = vperm.slane %v119, 0
  %v122 = vperm.slane %v119, 1
  %v123 = vperm.slane %v119, 2
  %127 = vmatpush.msra.mxu0 %v116
  %128 = vmatpush.msra.mxu0 %v113
  %129 = vmatpush.msra.mxu0 %v110
  %130 = vmatpush.msra.mxu0 %v107
  %131 = vmatpush.msra.mxu0 %v104
  %132 = vmatpush.msra.mxu0 %v101
  %133 = vmatpush.msra.mxu0 %v98
  %134 = vmatpush.msra.mxu0 %v95
  %135 = vmatpush.msra.mxu0 %v92
  %136 = vmatpush.msra.mxu0 %v89
  %137 = vmatpush.msra.mxu0 %v86
  %138 = vmatpush.msra.mxu0 %v83
  %139 = vmatpush.msra.mxu0 %v80
  %140 = vmatpush.msra.mxu0 %v77
  %141 = vmatpush.msra.mxu0 %v74
  %142 = vmatpush.msra.mxu0 %v71
  %143 = vmatmul.f32.gmra.mxu0 %v66
  %v144 = vpop.f32.mrf.mxu0
  %v145 = vadd.f32 %v121, %v144
  %146 = vmatmul.f32.gmra.mxu0 %v69
  %v147 = vpop.f32.mrf.mxu0
  %v148 = vadd.f32 %v121, %v147
  %149 = vdwg.mxu0
  %150 = vmatpush.msra.mxu0 %v117
  %151 = vmatpush.msra.mxu0 %v114
  %152 = vmatpush.msra.mxu0 %v111
  %153 = vmatpush.msra.mxu0 %v108
  %154 = vmatpush.msra.mxu0 %v105
  %155 = vmatpush.msra.mxu0 %v102
  %156 = vmatpush.msra.mxu0 %v99
  %157 = vmatpush.msra.mxu0 %v96
  %158 = vmatpush.msra.mxu0 %v93
  %159 = vmatpush.msra.mxu0 %v90
  %160 = vmatpush.msra.mxu0 %v87
  %161 = vmatpush.msra.mxu0 %v84
  %162 = vmatpush.msra.mxu0 %v81
  %163 = vmatpush.msra.mxu0 %v78
  %164 = vmatpush.msra.mxu0 %v75
  %165 = vmatpush.msra.mxu0 %v72
  %166 = vmatmul.f32.gmra.mxu0 %v66
  %v167 = vpop.f32.mrf.mxu0
  %v168 = vadd.f32 %v122, %v167
  %169 = vmatmul.f32.gmra.mxu0 %v69
  %v170 = vpop.f32.mrf.mxu0
  %v171 = vadd.f32 %v122, %v170
  %172 = vdwg.mxu0
  %173 = vmatpush.msra.mxu0 %v118
  %174 = vmatpush.msra.mxu0 %v115
  %175 = vmatpush.msra.mxu0 %v112
  %176 = vmatpush.msra.mxu0 %v109
  %177 = vmatpush.msra.mxu0 %v106
  %178 = vmatpush.msra.mxu0 %v103
  %179 = vmatpush.msra.mxu0 %v100
  %180 = vmatpush.msra.mxu0 %v97
  %181 = vmatpush.msra.mxu0 %v94
  %182 = vmatpush.msra.mxu0 %v91
  %183 = vmatpush.msra.mxu0 %v88
  %184 = vmatpush.msra.mxu0 %v85
  %185 = vmatpush.msra.mxu0 %v82
  %186 = vmatpush.msra.mxu0 %v79
  %187 = vmatpush.msra.mxu0 %v76
  %188 = vmatpush.msra.mxu0 %v73
  %189 = vmatmul.f32.gmra.mxu0 %v66
  %v190 = vpop.f32.mrf.mxu0
  %v191 = vadd.f32 %v123, %v190
  %192 = vmatmul.f32.gmra.mxu0 %v69
  %v193 = vpop.f32.mrf.mxu0
  %v194 = vadd.f32 %v123, %v193
  %195 = vdwg.mxu0
  %196 = vmatpush.xpose.msra.mxu0 0.0
  %197 = vmatpush.xpose.msra.mxu0 0.0
  %198 = vmatpush.xpose.msra.mxu0 0.0
  %199 = vmatpush.xpose.msra.mxu0 0.0
  %200 = vmatpush.xpose.msra.mxu0 0.0
  %201 = vmatpush.xpose.msra.mxu0 0.0
  %202 = vmatpush.xpose.msra.mxu0 0.0
  %203 = vmatpush.xpose.msra.mxu0 0.0
  %204 = vmatpush.xpose.msra.mxu0 0.0
  %205 = vmatpush.xpose.msra.mxu0 0.0
  %206 = vmatpush.xpose.msra.mxu0 0.0
  %207 = vmatpush.xpose.msra.mxu0 0.0
  %208 = vmatpush.xpose.msra.mxu0 0.0
  %209 = vmatpush.xpose.msra.mxu0 0.0
  %210 = vmatpush.xpose.msra.mxu0 %v171
  %211 = vmatpush.xpose.msra.mxu0 %v168
  %212 = vmatmul.f32.gmra.mxu0 %v145
  %v213 = vpop.f32.mrf.mxu0
  %v214 = vadd.f32 0.0, %v213
  %215 = vmatmul.f32.gmra.mxu0 %v148
  %v216 = vpop.f32.mrf.mxu0
  %v217 = vadd.f32 0.0, %v216
  %218 = vdwg.mxu0
  %vm219 = vcmask 130048
  %v220 = vsel %vm219, %v214, -inf
  %221 = vmax.xlane.f32.xlu0 %v220
  %v222 = vpop.xlane.xlu0 %221
  %v223 = vsel %vm219, %v217, -inf
  %224 = vmax.xlane.f32.xlu0 %v223
  %v225 = vpop.xlane.xlu0 %224
  %v226 = vmax.f32 %v222, %v225
  %v227 = vrot.slane %v226, 4
  %v228 = vmax.f32 %v226, %v227
  %v229 = vrot.slane %v228, 2
  %v230 = vmax.f32 %v228, %v229
  %v231 = vrot.slane %v230, 1
  %v232 = vmax.f32 %v230, %v231
  %v233 = vrcp.pop %v232
  %v234 = vmul.f32 %v214, %v233
  %v235 = vmul.f32 %v217, %v233
  %v236 = vsel %vm219, %v234, -inf
  %237 = vmax.xlane.f32.xlu0 %v236
  %v238 = vpop.xlane.xlu0 %237
  %v239 = vsel %vm219, %v235, -inf
  %240 = vmax.xlane.f32.xlu0 %v239
  %v241 = vpop.xlane.xlu0 %240
  %v242 = vsub.f32 %v234, %v238
  %v243 = vsub.f32 %v235, %v241
  %v244 = vmul.f32 %v242, 1.442695
  %v245 = vpow.pop %v244
  %v246 = vmul.f32 %v243, 1.442695
  %v247 = vpow.pop %v246
  %v248 = vsel %vm219, %v245, 0.0
  %249 = vadd.xlane.f32.xlu0 %v248
  %v250 = vpop.xlane.xlu0 %249
  %v251 = vsel %vm219, %v247, 0.0
  %252 = vadd.xlane.f32.xlu0 %v251
  %v253 = vpop.xlane.xlu0 %252
  %v254 = vrcp.pop %v250
  %v255 = vrcp.pop %v253
  %v256 = vmul.f32 %v245, %v254
  %v257 = vmul.f32 %v247, %v255
  %v259 = vsel %vm219, %v256, 0
  %v262 = vsel %vm219, %v257, 0
  %264 = vmatpush.msra.mxu0 0.0
  %265 = vmatpush.msra.mxu0 0.0
  %266 = vmatpush.msra.mxu0 0.0
  %267 = vmatpush.msra.mxu0 0.0
  %268 = vmatpush.msra.mxu0 0.0
  %269 = vmatpush.msra.mxu0 0.0
  %270 = vmatpush.msra.mxu0 0.0
  %271 = vmatpush.msra.mxu0 0.0
  %272 = vmatpush.msra.mxu0 0.0
  %273 = vmatpush.msra.mxu0 0.0
  %274 = vmatpush.msra.mxu0 0.0
  %275 = vmatpush.msra.mxu0 0.0
  %276 = vmatpush.msra.mxu0 0.0
  %277 = vmatpush.msra.mxu0 0.0
  %278 = vmatpush.msra.mxu0 %v194
  %279 = vmatpush.msra.mxu0 %v191
  %280 = vmatmul.f32.gmra.mxu0 %v259
  %v281 = vpop.f32.mrf.mxu0
  %v282 = vadd.f32 0.0, %v281
  %283 = vmatmul.f32.gmra.mxu0 %v262
  %v284 = vpop.f32.mrf.mxu0
  %v285 = vadd.f32 0.0, %v284
  %286 = vdwg.mxu0
  %v287 = vadd.f32 %v282, %v285
  %v288 = vrot.slane %v287, 4
  %v289 = vadd.f32 %v287, %v288
  %v290 = vrot.slane %v289, 2
  %v291 = vadd.f32 %v289, %v290
  %v292 = vrot.slane %v291, 1
  %v293 = vadd.f32 %v291, %v292
  %v294 = vrcp.pop 16.0
  %v295 = vmul.f32 16.0, %v294
  %v296 = vsub.f32 1.0, %v295
  %v297 = vmul.f32 %v294, %v296
  %v298 = vadd.f32 %v294, %v297
  %vm299 = vweird.f32 %v294
  %v300 = vsel %vm299, %v294, %v298
  %v301 = vmul.f32 %v293, %v300
  %302 = vst [vmem:[%s4] sm:$0x1] %v301
  // Predicated region
  $region18: #{sampled_self_attention.1} parent=0 // pred_check
    _
  $region19: #{sampled_self_attention.1} parent=0 // pred_check_branch
    %304 = sbr.rel (0) target = $region21
  $region20: #{sampled_self_attention.1} parent=0 // pred_region
    _
  $region21: #{sampled_self_attention.1} parent=0 // pred_fallthru
    _
  // Predicated region
  $region22: #{sampled_self_attention.1} parent=0 // pred_check
    _
  $region23: #{sampled_self_attention.1} parent=0 // pred_check_branch
    %306 = sbr.rel (0) target = $region25
  $region24: #{sampled_self_attention.1} parent=0 // pred_region
    _
  $region25: #{sampled_self_attention.1} parent=0 // pred_fallthru
    _

</llo_original>
